<compile_context>
chip_gen: v7x
topology: tpu7x:2x2x1
jax: 0.10.0
libtpu: 0.0.40
codegen_flags: <defaults>
</compile_context>

<pallas_src>
import math

import jax
import jax.numpy as jnp
from jax import lax
from jax.experimental import pallas as pl
from jax.experimental.pallas import tpu as pltpu

LN_EPS = 1e-5
LANE = 128


def _round_up(x, m):
    return (x + m - 1) // m * m


def _gelu_exact(h):
    # nn.GELU() default: exact erf-based GELU.
    return 0.5 * h * (1.0 + lax.erf(h * (1.0 / math.sqrt(2.0))))


def _make_kernel(d_valid: int):
    """Fused LinearEmbedding kernel; feature dims are padded to 128 lanes,
    LayerNorm statistics use only the first `d_valid` columns."""
    inv_d = 1.0 / float(d_valid)

    def ln_gelu(h, gamma, beta, col_mask):
        # Padded columns of h are exactly zero (zero-padded weights), so the
        # plain sum already covers only valid columns; the mask is only needed
        # so (h - mean) of padded columns does not pollute the variance.
        mean = jnp.sum(h, axis=-1, keepdims=True) * inv_d
        c = (h - mean) * col_mask
        var = jnp.sum(c * c, axis=-1, keepdims=True) * inv_d
        # gamma/beta are zero on padded columns -> padded lanes stay 0.
        hn = c * lax.rsqrt(var + LN_EPS) * gamma + beta
        return _gelu_exact(hn)

    def kernel(x_ref,                # (TB, dp_in)   bf16
               w1_ref,               # (dp_in, dp_out) bf16
               g1_ref, b1_ref,       # (1, dp_out)   f32
               w2_ref,               # (dp_out, dp_out) bf16
               g2_ref, b2_ref,       # (1, dp_out)   f32
               w3_ref,               # (dp_out, dp_out) bf16
               b3_ref,               # (1, dp_out)   f32
               o_ref):               # (TB, dp_out)  f32
        dp_out = o_ref.shape[-1]
        col_mask = (lax.broadcasted_iota(jnp.int32, (1, dp_out), 1)
                    < d_valid).astype(jnp.float32)

        # Linear 1 (no bias) -> LayerNorm -> GELU   (bf16 MXU, f32 accumulate)
        h = jnp.dot(x_ref[...], w1_ref[...], preferred_element_type=jnp.float32)
        a = ln_gelu(h, g1_ref[...], b1_ref[...], col_mask)

        # Linear 2 (no bias) -> LayerNorm -> GELU
        h = jnp.dot(a.astype(jnp.bfloat16), w2_ref[...],
                    preferred_element_type=jnp.float32)
        a = ln_gelu(h, g2_ref[...], b2_ref[...], col_mask)

        # Linear 3 (with bias)
        h = jnp.dot(a.astype(jnp.bfloat16), w3_ref[...],
                    preferred_element_type=jnp.float32) + b3_ref[...]

        o_ref[...] = h.astype(o_ref.dtype)

    return kernel


def linear_embedding(x, params, *, block_batch=256):
    """Fused LinearEmbedding forward.

    x: (B, in_features) float32.
    params: dict with w1 (in,out), w2/w3 (out,out), ln{1,2}_{g,b} (out,), b3 (out,).
    """
    B, d_in = x.shape
    d_out = int(params["w1"].shape[1])

    dp_in = _round_up(d_in, LANE)
    dp_out = _round_up(d_out, LANE)

    # Batch tile: at least 8 (sublane), at most block_batch; pad B up to it.
    tb = max(8, min(block_batch, _round_up(B, 8)))
    bp = _round_up(B, tb)
    grid = (bp // tb,)

    # --- pad + cast inputs/params (zero padding keeps padded lanes exactly 0).
    def pad2(w, r, c, dt):
        wp = jnp.zeros((r, c), dt)
        return wp.at[: w.shape[0], : w.shape[1]].set(w.astype(dt))

    xp = pad2(x, bp, dp_in, jnp.bfloat16)
    w1 = pad2(params["w1"], dp_in, dp_out, jnp.bfloat16)
    w2 = pad2(params["w2"], dp_out, dp_out, jnp.bfloat16)
    w3 = pad2(params["w3"], dp_out, dp_out, jnp.bfloat16)
    g1 = pad2(params["ln1_g"].reshape(1, -1), 1, dp_out, jnp.float32)
    b1 = pad2(params["ln1_b"].reshape(1, -1), 1, dp_out, jnp.float32)
    g2 = pad2(params["ln2_g"].reshape(1, -1), 1, dp_out, jnp.float32)
    b2 = pad2(params["ln2_b"].reshape(1, -1), 1, dp_out, jnp.float32)
    b3 = pad2(params["b3"].reshape(1, -1), 1, dp_out, jnp.float32)

    # --- BlockSpecs: activation tiles follow the batch grid index; weights and
    # LN params map to block (0, 0) on every step so they stay VMEM-resident.
    act_in_spec = pl.BlockSpec((tb, dp_in), lambda i: (i, 0))
    act_out_spec = pl.BlockSpec((tb, dp_out), lambda i: (i, 0))

    def resident(shape):
        return pl.BlockSpec(shape, lambda i: (0, 0))

    flops = 2 * bp * (dp_in * dp_out + 2 * dp_out * dp_out)
    bytes_accessed = (xp.size * 2                                   # bf16 x
                      + (w1.size + w2.size + w3.size) * 2           # bf16 weights
                      + (g1.size + b1.size + g2.size + b2.size + b3.size) * 4
                      + bp * dp_out * 4)                            # f32 out
    cost = pl.CostEstimate(flops=flops,
                           transcendentals=2 * bp * dp_out,         # 2x GELU erf
                           bytes_accessed=bytes_accessed)

    # NOTE: for very large out_features (>~2300 in bf16 on v7x's 64 MiB VMEM)
    # a K/N tiling grid axis would be needed instead of fully resident weights.
    out = pl.pallas_call(
        _make_kernel(d_out),
        grid=grid,
        in_specs=[
            act_in_spec,
            resident((dp_in, dp_out)),
            resident((1, dp_out)), resident((1, dp_out)),
            resident((dp_out, dp_out)),
            resident((1, dp_out)), resident((1, dp_out)),
            resident((dp_out, dp_out)),
            resident((1, dp_out)),
        ],
        out_specs=act_out_spec,
        out_shape=jax.ShapeDtypeStruct((bp, dp_out), jnp.float32),
        compiler_params=pltpu.CompilerParams(
            dimension_semantics=("parallel",)),
        cost_estimate=cost,
    )(xp, w1, g1, b1, w2, g2, b2, w3, b3)

    return out[:B, :d_out]


def init_params(key, in_features, out_features):
    ks = jax.random.split(key, 4)
    w1 = jax.random.normal(ks[0], (in_features, out_features), jnp.float32) / math.sqrt(in_features)
    w2 = jax.random.normal(ks[1], (out_features, out_features), jnp.float32) / math.sqrt(out_features)
    w3 = jax.random.normal(ks[2], (out_features, out_features), jnp.float32) / math.sqrt(out_features)
    b3 = jax.random.normal(ks[3], (out_features,), jnp.float32) * 0.01
    ln1_g = jnp.ones((out_features,), jnp.float32)
    ln1_b = jnp.zeros((out_features,), jnp.float32)
    ln2_g = jnp.ones((out_features,), jnp.float32)
    ln2_b = jnp.zeros((out_features,), jnp.float32)
    return dict(w1=w1, ln1_g=ln1_g, ln1_b=ln1_b,
                w2=w2, ln2_g=ln2_g, ln2_b=ln2_b,
                w3=w3, b3=b3)


def _layernorm(h, gamma, beta):
    mean = jnp.mean(h, axis=-1, keepdims=True)
    c = h - mean
    var = jnp.mean(c * c, axis=-1, keepdims=True)
    return c * lax.rsqrt(var + LN_EPS) * gamma + beta


def reference_bf16(x, p):
    """Matched-precision pure-JAX reference (bf16 matmul operands, f32 acc)."""
    def bd(a, w):
        return jnp.dot(a.astype(jnp.bfloat16).astype(jnp.float32),
                       w.astype(jnp.bfloat16).astype(jnp.float32),
                       preferred_element_type=jnp.float32)
    h = _gelu_exact(_layernorm(bd(x, p["w1"]), p["ln1_g"], p["ln1_b"]))
    h = _gelu_exact(_layernorm(bd(h, p["w2"]), p["ln2_g"], p["ln2_b"]))
    return bd(h, p["w3"]) + p["b3"]


def reference_f32(x, p):
    """Full-f32 reference matching the original PyTorch module exactly."""
    h = _gelu_exact(_layernorm(x @ p["w1"], p["ln1_g"], p["ln1_b"]))
    h = _gelu_exact(_layernorm(h @ p["w2"], p["ln2_g"], p["ln2_b"]))
    return h @ p["w3"] + p["b3"]


if __name__ == "__main__":
    key = jax.random.PRNGKey(0)
    kx, kp, kx2 = jax.random.split(key, 3)

    # classEncoder-style embedding from UNetDeep: in_features = numClasses = 10.
    B, in_features, out_features = 8, 10, 32
    x = jax.random.normal(kx, (B, in_features), jnp.float32)
    params = init_params(kp, in_features, out_features)

    out = jax.block_until_ready(linear_embedding(x, params))
    assert out.shape == (B, out_features)

    ref = reference_bf16(x, params)
    assert jnp.allclose(out, ref, atol=1e-3, rtol=1e-3), "mismatch vs matched-precision reference"
    # Semantics vs full-f32 (PyTorch) math: only bf16 weight/activation rounding differs.
    ref32 = reference_f32(x, params)
    assert jnp.allclose(out, ref32, atol=5e-2, rtol=5e-2), "mismatch vs f32 reference"

    # Multi-tile grid path: batch padded to 3 tiles of 128 rows.
    B2 = 300
    x2 = jax.random.normal(kx2, (B2, in_features), jnp.float32)
    out2 = jax.block_until_ready(linear_embedding(x2, params, block_batch=128))
    assert out2.shape == (B2, out_features)
    ref2 = reference_bf16(x2, params)
    assert jnp.allclose(out2, ref2, atol=1e-3, rtol=1e-3), "mismatch on multi-tile grid"

    print("KERNEL_OK")
</pallas_src>

<mosaic_0001>
module attributes {stable_mosaic.version = 11 : i64} {
  func.func @kernel(%arg0: i32, %arg1: memref<8x128xbf16, #tpu.memory_space<vmem>>, %arg2: memref<128x128xbf16, #tpu.memory_space<vmem>>, %arg3: memref<1x128xf32, #tpu.memory_space<vmem>>, %arg4: memref<1x128xf32, #tpu.memory_space<vmem>>, %arg5: memref<128x128xbf16, #tpu.memory_space<vmem>>, %arg6: memref<1x128xf32, #tpu.memory_space<vmem>>, %arg7: memref<1x128xf32, #tpu.memory_space<vmem>>, %arg8: memref<128x128xbf16, #tpu.memory_space<vmem>>, %arg9: memref<1x128xf32, #tpu.memory_space<vmem>>, %arg10: memref<8x128xf32, #tpu.memory_space<vmem>>) attributes {dimension_semantics = [#tpu.dimension_semantics<parallel>], iteration_bounds = array<i64: 1>, scalar_prefetch = 0 : i64, scratch_operands = 0 : i64, tpu.core_type = #tpu.core_type<tc>, window_params = [{transform_indices = @transform_0, window_bounds = array<i64: 8, 128>}, {pipeline_mode = #tpu.pipeline_mode<synchronous>, transform_indices = @transform_1, window_bounds = array<i64: 128, 128>}, {pipeline_mode = #tpu.pipeline_mode<synchronous>, transform_indices = @transform_2, window_bounds = array<i64: 1, 128>}, {pipeline_mode = #tpu.pipeline_mode<synchronous>, transform_indices = @transform_3, window_bounds = array<i64: 1, 128>}, {pipeline_mode = #tpu.pipeline_mode<synchronous>, transform_indices = @transform_4, window_bounds = array<i64: 128, 128>}, {pipeline_mode = #tpu.pipeline_mode<synchronous>, transform_indices = @transform_5, window_bounds = array<i64: 1, 128>}, {pipeline_mode = #tpu.pipeline_mode<synchronous>, transform_indices = @transform_6, window_bounds = array<i64: 1, 128>}, {pipeline_mode = #tpu.pipeline_mode<synchronous>, transform_indices = @transform_7, window_bounds = array<i64: 128, 128>}, {pipeline_mode = #tpu.pipeline_mode<synchronous>, transform_indices = @transform_8, window_bounds = array<i64: 1, 128>}, {transform_indices = @transform_9, window_bounds = array<i64: 8, 128>}]} {
    %0 = tpu.iota {dimensions = array<i32: 1>} : vector<1x128xi32>
    %c32_i32 = arith.constant 32 : i32
    %1 = vector.broadcast %c32_i32 : i32 to vector<1x128xi32>
    %2 = arith.cmpi slt, %0, %1 : vector<1x128xi32>
    %3 = arith.extui %2 : vector<1x128xi1> to vector<1x128xi32>
    %4 = arith.sitofp %3 : vector<1x128xi32> to vector<1x128xf32>
    %c0 = arith.constant 0 : index
    %c0_0 = arith.constant 0 : index
    %5 = vector.load %arg1[%c0, %c0_0] : memref<8x128xbf16, #tpu.memory_space<vmem>>, vector<8x128xbf16>
    %c0_1 = arith.constant 0 : index
    %c0_2 = arith.constant 0 : index
    %6 = vector.load %arg2[%c0_1, %c0_2] : memref<128x128xbf16, #tpu.memory_space<vmem>>, vector<128x128xbf16>
    %cst = arith.constant dense<0.000000e+00> : vector<8x128xf32>
    %7 = tpu.matmul %5, %6, %cst {dimension_numbers = #tpu.dot_dimension_numbers<[1], [0], [0], [1], [0, 0, 1, 1], [], []>} : vector<8x128xbf16>, vector<128x128xbf16>, vector<8x128xf32> -> vector<8x128xf32>
    %c0_3 = arith.constant 0 : index
    %c0_4 = arith.constant 0 : index
    %8 = vector.load %arg3[%c0_3, %c0_4] : memref<1x128xf32, #tpu.memory_space<vmem>>, vector<1x128xf32>
    %c0_5 = arith.constant 0 : index
    %c0_6 = arith.constant 0 : index
    %9 = vector.load %arg4[%c0_5, %c0_6] : memref<1x128xf32, #tpu.memory_space<vmem>>, vector<1x128xf32>
    %cst_7 = arith.constant dense<0.000000e+00> : vector<8xf32>
    %10 = vector.multi_reduction <add>, %7, %cst_7 [1] : vector<8x128xf32> to vector<8xf32>
    %11 = vector.shape_cast %10 : vector<8xf32> to vector<8x1xf32>
    %cst_8 = arith.constant 3.125000e-02 : f32
    %12 = vector.broadcast %cst_8 : f32 to vector<8x1xf32>
    %13 = arith.mulf %11, %12 : vector<8x1xf32>
    %14 = vector.broadcast %13 : vector<8x1xf32> to vector<8x128xf32>
    %15 = arith.subf %7, %14 : vector<8x128xf32>
    %16 = vector.broadcast %4 : vector<1x128xf32> to vector<8x128xf32>
    %17 = arith.mulf %15, %16 : vector<8x128xf32>
    %18 = arith.mulf %17, %17 : vector<8x128xf32>
    %cst_9 = arith.constant dense<0.000000e+00> : vector<8xf32>
    %19 = vector.multi_reduction <add>, %18, %cst_9 [1] : vector<8x128xf32> to vector<8xf32>
    %20 = vector.shape_cast %19 : vector<8xf32> to vector<8x1xf32>
    %cst_10 = arith.constant 3.125000e-02 : f32
    %21 = vector.broadcast %cst_10 : f32 to vector<8x1xf32>
    %22 = arith.mulf %20, %21 : vector<8x1xf32>
    %cst_11 = arith.constant 9.99999974E-6 : f32
    %23 = vector.broadcast %cst_11 : f32 to vector<8x1xf32>
    %24 = arith.addf %22, %23 : vector<8x1xf32>
    %25 = math.rsqrt %24 : vector<8x1xf32>
    %26 = vector.broadcast %25 : vector<8x1xf32> to vector<8x128xf32>
    %27 = arith.mulf %17, %26 : vector<8x128xf32>
    %28 = vector.broadcast %8 : vector<1x128xf32> to vector<8x128xf32>
    %29 = arith.mulf %27, %28 : vector<8x128xf32>
    %30 = vector.broadcast %9 : vector<1x128xf32> to vector<8x128xf32>
    %31 = arith.addf %29, %30 : vector<8x128xf32>
    %cst_12 = arith.constant 5.000000e-01 : f32
    %32 = vector.broadcast %cst_12 : f32 to vector<8x128xf32>
    %33 = arith.mulf %32, %31 : vector<8x128xf32>
    %cst_13 = arith.constant 0.707106769 : f32
    %34 = vector.broadcast %cst_13 : f32 to vector<8x128xf32>
    %35 = arith.mulf %31, %34 : vector<8x128xf32>
    %36 = math.erf %35 : vector<8x128xf32>
    %cst_14 = arith.constant 1.000000e+00 : f32
    %37 = vector.broadcast %cst_14 : f32 to vector<8x128xf32>
    %38 = arith.addf %37, %36 : vector<8x128xf32>
    %39 = arith.mulf %33, %38 : vector<8x128xf32>
    %40 = arith.truncf %39 : vector<8x128xf32> to vector<8x128xbf16>
    %c0_15 = arith.constant 0 : index
    %c0_16 = arith.constant 0 : index
    %41 = vector.load %arg5[%c0_15, %c0_16] : memref<128x128xbf16, #tpu.memory_space<vmem>>, vector<128x128xbf16>
    %cst_17 = arith.constant dense<0.000000e+00> : vector<8x128xf32>
    %42 = tpu.matmul %40, %41, %cst_17 {dimension_numbers = #tpu.dot_dimension_numbers<[1], [0], [0], [1], [0, 0, 1, 1], [], []>} : vector<8x128xbf16>, vector<128x128xbf16>, vector<8x128xf32> -> vector<8x128xf32>
    %c0_18 = arith.constant 0 : index
    %c0_19 = arith.constant 0 : index
    %43 = vector.load %arg6[%c0_18, %c0_19] : memref<1x128xf32, #tpu.memory_space<vmem>>, vector<1x128xf32>
    %c0_20 = arith.constant 0 : index
    %c0_21 = arith.constant 0 : index
    %44 = vector.load %arg7[%c0_20, %c0_21] : memref<1x128xf32, #tpu.memory_space<vmem>>, vector<1x128xf32>
    %cst_22 = arith.constant dense<0.000000e+00> : vector<8xf32>
    %45 = vector.multi_reduction <add>, %42, %cst_22 [1] : vector<8x128xf32> to vector<8xf32>
    %46 = vector.shape_cast %45 : vector<8xf32> to vector<8x1xf32>
    %cst_23 = arith.constant 3.125000e-02 : f32
    %47 = vector.broadcast %cst_23 : f32 to vector<8x1xf32>
    %48 = arith.mulf %46, %47 : vector<8x1xf32>
    %49 = vector.broadcast %48 : vector<8x1xf32> to vector<8x128xf32>
    %50 = arith.subf %42, %49 : vector<8x128xf32>
    %51 = vector.broadcast %4 : vector<1x128xf32> to vector<8x128xf32>
    %52 = arith.mulf %50, %51 : vector<8x128xf32>
    %53 = arith.mulf %52, %52 : vector<8x128xf32>
    %cst_24 = arith.constant dense<0.000000e+00> : vector<8xf32>
    %54 = vector.multi_reduction <add>, %53, %cst_24 [1] : vector<8x128xf32> to vector<8xf32>
    %55 = vector.shape_cast %54 : vector<8xf32> to vector<8x1xf32>
    %cst_25 = arith.constant 3.125000e-02 : f32
    %56 = vector.broadcast %cst_25 : f32 to vector<8x1xf32>
    %57 = arith.mulf %55, %56 : vector<8x1xf32>
    %cst_26 = arith.constant 9.99999974E-6 : f32
    %58 = vector.broadcast %cst_26 : f32 to vector<8x1xf32>
    %59 = arith.addf %57, %58 : vector<8x1xf32>
    %60 = math.rsqrt %59 : vector<8x1xf32>
    %61 = vector.broadcast %60 : vector<8x1xf32> to vector<8x128xf32>
    %62 = arith.mulf %52, %61 : vector<8x128xf32>
    %63 = vector.broadcast %43 : vector<1x128xf32> to vector<8x128xf32>
    %64 = arith.mulf %62, %63 : vector<8x128xf32>
    %65 = vector.broadcast %44 : vector<1x128xf32> to vector<8x128xf32>
    %66 = arith.addf %64, %65 : vector<8x128xf32>
    %cst_27 = arith.constant 5.000000e-01 : f32
    %67 = vector.broadcast %cst_27 : f32 to vector<8x128xf32>
    %68 = arith.mulf %67, %66 : vector<8x128xf32>
    %cst_28 = arith.constant 0.707106769 : f32
    %69 = vector.broadcast %cst_28 : f32 to vector<8x128xf32>
    %70 = arith.mulf %66, %69 : vector<8x128xf32>
    %71 = math.erf %70 : vector<8x128xf32>
    %cst_29 = arith.constant 1.000000e+00 : f32
    %72 = vector.broadcast %cst_29 : f32 to vector<8x128xf32>
    %73 = arith.addf %72, %71 : vector<8x128xf32>
    %74 = arith.mulf %68, %73 : vector<8x128xf32>
    %75 = arith.truncf %74 : vector<8x128xf32> to vector<8x128xbf16>
    %c0_30 = arith.constant 0 : index
    %c0_31 = arith.constant 0 : index
    %76 = vector.load %arg8[%c0_30, %c0_31] : memref<128x128xbf16, #tpu.memory_space<vmem>>, vector<128x128xbf16>
    %cst_32 = arith.constant dense<0.000000e+00> : vector<8x128xf32>
    %77 = tpu.matmul %75, %76, %cst_32 {dimension_numbers = #tpu.dot_dimension_numbers<[1], [0], [0], [1], [0, 0, 1, 1], [], []>} : vector<8x128xbf16>, vector<128x128xbf16>, vector<8x128xf32> -> vector<8x128xf32>
    %c0_33 = arith.constant 0 : index
    %c0_34 = arith.constant 0 : index
    %78 = vector.load %arg9[%c0_33, %c0_34] : memref<1x128xf32, #tpu.memory_space<vmem>>, vector<1x128xf32>
    %79 = vector.broadcast %78 : vector<1x128xf32> to vector<8x128xf32>
    %80 = arith.addf %77, %79 : vector<8x128xf32>
    %c0_35 = arith.constant 0 : index
    %c0_36 = arith.constant 0 : index
    %81 = vector.load %arg10[%c0_35, %c0_36] : memref<8x128xf32, #tpu.memory_space<vmem>>, vector<8x128xf32>
    tpu.vector_store %arg10[%c0_35, %c0_36], %80 {strides = array<i32>} : memref<8x128xf32, #tpu.memory_space<vmem>>, vector<8x128xf32>,
    return
  }
  func.func @transform_0(%arg0: i32) -> (i32, i32) {
    %c0_i32 = arith.constant 0 : i32
    %c0_i32_0 = arith.constant 0 : i32
    return %arg0, %c0_i32 : i32, i32
  }
  func.func @transform_1(%arg0: i32) -> (i32, i32) {
    %c0_i32 = arith.constant 0 : i32
    %c0_i32_0 = arith.constant 0 : i32
    %c0_i32_1 = arith.constant 0 : i32
    return %c0_i32, %c0_i32_0 : i32, i32
  }
  func.func @transform_2(%arg0: i32) -> (i32, i32) {
    %c0_i32 = arith.constant 0 : i32
    %c0_i32_0 = arith.constant 0 : i32
    %c0_i32_1 = arith.constant 0 : i32
    return %c0_i32, %c0_i32_0 : i32, i32
  }
  func.func @transform_3(%arg0: i32) -> (i32, i32) {
    %c0_i32 = arith.constant 0 : i32
    %c0_i32_0 = arith.constant 0 : i32
    %c0_i32_1 = arith.constant 0 : i32
    return %c0_i32, %c0_i32_0 : i32, i32
  }
  func.func @transform_4(%arg0: i32) -> (i32, i32) {
    %c0_i32 = arith.constant 0 : i32
    %c0_i32_0 = arith.constant 0 : i32
    %c0_i32_1 = arith.constant 0 : i32
    return %c0_i32, %c0_i32_0 : i32, i32
  }
  func.func @transform_5(%arg0: i32) -> (i32, i32) {
    %c0_i32 = arith.constant 0 : i32
    %c0_i32_0 = arith.constant 0 : i32
    %c0_i32_1 = arith.constant 0 : i32
    return %c0_i32, %c0_i32_0 : i32, i32
  }
  func.func @transform_6(%arg0: i32) -> (i32, i32) {
    %c0_i32 = arith.constant 0 : i32
    %c0_i32_0 = arith.constant 0 : i32
    %c0_i32_1 = arith.constant 0 : i32
    return %c0_i32, %c0_i32_0 : i32, i32
  }
  func.func @transform_7(%arg0: i32) -> (i32, i32) {
    %c0_i32 = arith.constant 0 : i32
    %c0_i32_0 = arith.constant 0 : i32
    %c0_i32_1 = arith.constant 0 : i32
    return %c0_i32, %c0_i32_0 : i32, i32
  }
  func.func @transform_8(%arg0: i32) -> (i32, i32) {
    %c0_i32 = arith.constant 0 : i32
    %c0_i32_0 = arith.constant 0 : i32
    %c0_i32_1 = arith.constant 0 : i32
    return %c0_i32, %c0_i32_0 : i32, i32
  }
  func.func @transform_9(%arg0: i32) -> (i32, i32) {
    %c0_i32 = arith.constant 0 : i32
    %c0_i32_0 = arith.constant 0 : i32
    return %arg0, %c0_i32 : i32, i32
  }
}

</mosaic_0001>

<llo_original>
// kernel: tpu_custom_call.1
$region0: #{tpu_custom_call.1}
  #allocation0 [shape = 'u32[]', space=smem, size = 0x4, offset = 0x4, fixed_abs, tag = 'smem constant byte address 0x4 - core index']
  #allocation1 [shape = 'u32[144,128]{1,0:T(1,128)}', space=vmem, size = 0x12000, scoped, tag = 'internal scratch']
  %s0 = inlined_call_operand.hbm [shape: bf16[8,128], index: 0, kind: input, shape index: {}]
  %s1 = inlined_call_operand.hbm [shape: bf16[128,128], index: 1, kind: input, shape index: {}]
  %s2 = inlined_call_operand.vmem [shape: f32[1,128], index: 2, kind: input, shape index: {}]
  %s3 = inlined_call_operand.vmem [shape: f32[1,128], index: 3, kind: input, shape index: {}]
  %s4 = inlined_call_operand.hbm [shape: bf16[128,128], index: 4, kind: input, shape index: {}]
  %s5 = inlined_call_operand.vmem [shape: f32[1,128], index: 5, kind: input, shape index: {}]
  %s6 = inlined_call_operand.vmem [shape: f32[1,128], index: 6, kind: input, shape index: {}]
  %s7 = inlined_call_operand.hbm [shape: bf16[128,128], index: 7, kind: input, shape index: {}]
  %s8 = inlined_call_operand.vmem [shape: f32[1,128], index: 8, kind: input, shape index: {}]
  %s9 = inlined_call_operand.hbm [shape: f32[8,128], index: 9, kind: output, shape index: {}]
  %s10 = sld [smem:[#allocation0]]
  $region62: #{tpu_custom_call.1} parent=0
    _
  %s12 = ssub.s32 1, %s10
  %s13 = scalar_select 0, %s12, %s10
  $region1: #{tpu_custom_call.1} parent=0
    #allocation2 [shape = 'u8[2048]{0}', space=vmem, size = 0x800, scoped, tag = 'input window, operand 0, single buffered']
    #allocation3 [shape = 's32[1]{0}', space=sflag, size = 0x4, scoped, tag = 'scoped memory for tpu_custom_call.1']
    #allocation4 [shape = 's32[1]{0}', space=sflag, size = 0x4, scoped, tag = 'scoped memory for tpu_custom_call.1']
    #allocation5 [shape = 'u8[32768]{0}', space=vmem, size = 0x8000, scoped, tag = 'input window, operand 1, single buffered']
    #allocation6 [shape = 's32[1]{0}', space=sflag, size = 0x4, scoped, tag = 'scoped memory for tpu_custom_call.1']
    #allocation7 [shape = 'u8[32768]{0}', space=vmem, size = 0x8000, scoped, tag = 'input window, operand 4, single buffered']
    #allocation8 [shape = 'u8[32768]{0}', space=vmem, size = 0x8000, scoped, tag = 'input window, operand 7, single buffered']
    #allocation9 [shape = 's32[1]{0}', space=sflag, size = 0x4, scoped, tag = 'scoped memory for tpu_custom_call.1']
    #allocation10 [shape = 'u8[4096]{0}', space=vmem, size = 0x1000, scoped, tag = 'output window, operand 0, single buffered']
    %14 = vsyncpa [#allocation3], 0
    %15 = vsyncpa [#allocation6], 0
    %16 = vsyncpa [#allocation9], 0
    %17 = vsyncpa [#allocation4], 0
    // Predicated region
    $region2: #{tpu_custom_call.1} parent=1 // pred_check
      _
    $region3: #{tpu_custom_call.1} parent=1 // pred_check_branch
      %19 = sbr.rel (0) target = $region5
    $region4: #{tpu_custom_call.1} parent=1 // pred_region
      %s21 = ssub.s32 64, 64
      %22 = vsyncadd [#allocation3], %s21
      %s24 = sshll.u32 [#allocation2], 4
      %s25 = int_to_ptr.vmem [resolvable:$true] %s24
      %27 = dma.hbm_to_vmem [thread:$0]  %s0, 64, %s25, [#allocation3]
    $region5: #{tpu_custom_call.1} parent=1 // pred_fallthru
      _
    // Predicated region
    $region6: #{tpu_custom_call.1} parent=1 // pred_check
      _
    $region7: #{tpu_custom_call.1} parent=1 // pred_check_branch
      %29 = sbr.rel (0) target = $region9
    $region8: #{tpu_custom_call.1} parent=1 // pred_region
      %s31 = ssub.s32 1024, 1024
      %32 = vsyncadd [#allocation6], %s31
      %s33 = sshll.u32 [#allocation5], 4
      %s34 = int_to_ptr.vmem [resolvable:$true] %s33
      %39 = dma.hbm_to_vmem [thread:$0]  %s1, 1024, %s34, [#allocation6], 64, 64, 4
    $region9: #{tpu_custom_call.1} parent=1 // pred_fallthru
      _
    // Predicated region
    $region10: #{tpu_custom_call.1} parent=1 // pred_check
      _
    $region11: #{tpu_custom_call.1} parent=1 // pred_check_branch
      %41 = sbr.rel (0) target = $region13
    $region12: #{tpu_custom_call.1} parent=1 // pred_region
      _
    $region13: #{tpu_custom_call.1} parent=1 // pred_fallthru
      _
    // Predicated region
    $region14: #{tpu_custom_call.1} parent=1 // pred_check
      _
    $region15: #{tpu_custom_call.1} parent=1 // pred_check_branch
      %43 = sbr.rel (0) target = $region17
    $region16: #{tpu_custom_call.1} parent=1 // pred_region
      _
    $region17: #{tpu_custom_call.1} parent=1 // pred_fallthru
      _
    // Predicated region
    $region18: #{tpu_custom_call.1} parent=1 // pred_check
      _
    $region19: #{tpu_custom_call.1} parent=1 // pred_check_branch
      %45 = sbr.rel (0) target = $region21
    $region20: #{tpu_custom_call.1} parent=1 // pred_region
      %s47 = ssub.s32 1024, 1024
      %48 = vsyncadd [#allocation6], %s47
      %s49 = sshll.u32 [#allocation7], 4
      %s50 = int_to_ptr.vmem [resolvable:$true] %s49
      %55 = dma.hbm_to_vmem [thread:$0]  %s4, 1024, %s50, [#allocation6], 64, 64, 4
    $region21: #{tpu_custom_call.1} parent=1 // pred_fallthru
      _
    // Predicated region
    $region22: #{tpu_custom_call.1} parent=1 // pred_check
      _
    $region23: #{tpu_custom_call.1} parent=1 // pred_check_branch
      %57 = sbr.rel (0) target = $region25
    $region24: #{tpu_custom_call.1} parent=1 // pred_region
      _
    $region25: #{tpu_custom_call.1} parent=1 // pred_fallthru
      _
    // Predicated region
    $region26: #{tpu_custom_call.1} parent=1 // pred_check
      _
    $region27: #{tpu_custom_call.1} parent=1 // pred_check_branch
      %59 = sbr.rel (0) target = $region29
    $region28: #{tpu_custom_call.1} parent=1 // pred_region
      _
    $region29: #{tpu_custom_call.1} parent=1 // pred_fallthru
      _
    // Predicated region
    $region30: #{tpu_custom_call.1} parent=1 // pred_check
      _
    $region31: #{tpu_custom_call.1} parent=1 // pred_check_branch
      %61 = sbr.rel (0) target = $region33
    $region32: #{tpu_custom_call.1} parent=1 // pred_region
      %s63 = ssub.s32 1024, 1024
      %64 = vsyncadd [#allocation9], %s63
      %s65 = sshll.u32 [#allocation8], 4
      %s66 = int_to_ptr.vmem [resolvable:$true] %s65
      %71 = dma.hbm_to_vmem [thread:$0]  %s7, 1024, %s66, [#allocation9], 64, 64, 4
    $region33: #{tpu_custom_call.1} parent=1 // pred_fallthru
      _
    // Predicated region
    $region34: #{tpu_custom_call.1} parent=1 // pred_check
      _
    $region35: #{tpu_custom_call.1} parent=1 // pred_check_branch
      %73 = sbr.rel (0) target = $region37
    $region36: #{tpu_custom_call.1} parent=1 // pred_region
      _
    $region37: #{tpu_custom_call.1} parent=1 // pred_fallthru
      _
    // Predicated region
    $region38: #{tpu_custom_call.1} parent=1 // pred_check
      _
    $region39: #{tpu_custom_call.1} parent=1 // pred_check_branch
      %75 = sbr.rel (0) target = $region41
    $region40: #{tpu_custom_call.1} parent=1 // pred_region
      %76 = dma.done [#allocation3], 64
    $region41: #{tpu_custom_call.1} parent=1 // pred_fallthru
      _
    // Predicated region
    $region42: #{tpu_custom_call.1} parent=1 // pred_check
      _
    $region43: #{tpu_custom_call.1} parent=1 // pred_check_branch
      %78 = sbr.rel (0) target = $region45
    $region44: #{tpu_custom_call.1} parent=1 // pred_region
      %79 = dma.done [#allocation6], 1024
    $region45: #{tpu_custom_call.1} parent=1 // pred_fallthru
      _
    // Predicated region
    $region46: #{tpu_custom_call.1} parent=1 // pred_check
      _
    $region47: #{tpu_custom_call.1} parent=1 // pred_check_branch
      %81 = sbr.rel (0) target = $region49
    $region48: #{tpu_custom_call.1} parent=1 // pred_region
      %82 = dma.done [#allocation6], 1024
    $region49: #{tpu_custom_call.1} parent=1 // pred_fallthru
      _
    // Predicated region
    $region50: #{tpu_custom_call.1} parent=1 // pred_check
      _
    $region51: #{tpu_custom_call.1} parent=1 // pred_check_branch
      %84 = sbr.rel (0) target = $region53
    $region52: #{tpu_custom_call.1} parent=1 // pred_region
      %85 = dma.done [#allocation9], 1024
    $region53: #{tpu_custom_call.1} parent=1 // pred_fallthru
      _
    %v87 = vlaneseq
    %v88 = vand.u32 %v87, 127
    %vm89 = vcmp.lt.s32.totalorder %v88, 32
    %v90 = vsel %vm89, 1, 0
    %v91 = vcvt.s32.f32 %v90
    %v92 = vld [vmem:[#allocation2] sm:$0xf]
    %v93 = vld [vmem:[#allocation5] sm:$0xf]
    %v94 = vld [vmem:[#allocation5 + $0x4] sm:$0xf]
    %v95 = vld [vmem:[#allocation5 + $0x8] sm:$0xf]
    %v96 = vld [vmem:[#allocation5 + $0xc] sm:$0xf]
    %v97 = vld [vmem:[#allocation5 + $0x10] sm:$0xf]
    %v98 = vld [vmem:[#allocation5 + $0x14] sm:$0xf]
    %v99 = vld [vmem:[#allocation5 + $0x18] sm:$0xf]
    %v100 = vld [vmem:[#allocation5 + $0x1c] sm:$0xf]
    %v101 = vld [vmem:[#allocation5 + $0x20] sm:$0xf]
    %v102 = vld [vmem:[#allocation5 + $0x24] sm:$0xf]
    %v103 = vld [vmem:[#allocation5 + $0x28] sm:$0xf]
    %v104 = vld [vmem:[#allocation5 + $0x2c] sm:$0xf]
    %v105 = vld [vmem:[#allocation5 + $0x30] sm:$0xf]
    %v106 = vld [vmem:[#allocation5 + $0x34] sm:$0xf]
    %v107 = vld [vmem:[#allocation5 + $0x38] sm:$0xf]
    %v108 = vld [vmem:[#allocation5 + $0x3c] sm:$0xf]
    %v125 = vunpack.c.l.b16 %v93
    %v126 = vunpack.c.l.b16 %v94
    %v127 = vunpack.c.l.b16 %v95
    %v128 = vunpack.c.l.b16 %v96
    %v129 = vunpack.c.l.b16 %v97
    %v130 = vunpack.c.l.b16 %v98
    %v131 = vunpack.c.l.b16 %v99
    %v132 = vunpack.c.l.b16 %v100
    %v133 = vunpack.c.l.b16 %v101
    %v134 = vunpack.c.l.b16 %v102
    %v135 = vunpack.c.l.b16 %v103
    %v136 = vunpack.c.l.b16 %v104
    %v137 = vunpack.c.l.b16 %v105
    %v138 = vunpack.c.l.b16 %v106
    %v139 = vunpack.c.l.b16 %v107
    %v140 = vunpack.c.l.b16 %v108
    %v141 = vpack.c.b16 %v126, %v125
    %v142 = vpack.c.b16 %v128, %v127
    %v143 = vpack.c.b16 %v130, %v129
    %v144 = vpack.c.b16 %v132, %v131
    %v145 = vpack.c.b16 %v134, %v133
    %v146 = vpack.c.b16 %v136, %v135
    %v147 = vpack.c.b16 %v138, %v137
    %v148 = vpack.c.b16 %v140, %v139
    %157 = vmatprep.subr.bf16.mxu0 0
    %158 = vmatpush1.bf16.msra.mxu0 %v141
    %159 = vmatprep.subr.bf16.mxu0 0
    %160 = vmatpush1.bf16.msra.mxu0 %v142
    %161 = vmatprep.subr.bf16.mxu0 0
    %162 = vmatpush1.bf16.msra.mxu0 %v143
    %163 = vmatprep.subr.bf16.mxu0 0
    %164 = vmatpush1.bf16.msra.mxu0 %v144
    %165 = vmatprep.subr.bf16.mxu0 0
    %166 = vmatpush1.bf16.msra.mxu0 %v145
    %167 = vmatprep.subr.bf16.mxu0 0
    %168 = vmatpush1.bf16.msra.mxu0 %v146
    %169 = vmatprep.subr.bf16.mxu0 0
    %170 = vmatpush1.bf16.msra.mxu0 %v147
    %171 = vmatprep.subr.bf16.mxu0 0
    %172 = vmatpush1.bf16.msra.mxu0 %v148
    %173 = vmatprep.subr.bf16.mxu0 0
    %174 = vmatpush1.bf16.msra.mxu0 0
    %175 = vmatprep.subr.bf16.mxu0 0
    %176 = vmatpush1.bf16.msra.mxu0 0
    %177 = vmatprep.subr.bf16.mxu0 0
    %178 = vmatpush1.bf16.msra.mxu0 0
    %179 = vmatprep.subr.bf16.mxu0 0
    %180 = vmatpush1.bf16.msra.mxu0 0
    %181 = vmatprep.subr.bf16.mxu0 0
    %182 = vmatpush1.bf16.msra.mxu0 0
    %183 = vmatprep.subr.bf16.mxu0 0
    %184 = vmatpush1.bf16.msra.mxu0 0
    %185 = vmatprep.subr.bf16.mxu0 0
    %186 = vmatpush1.bf16.msra.mxu0 0
    %187 = vmatprep.subr.bf16.mxu0 0
    %188 = vmatpush1.bf16.msra.mxu0 0
    %189 = vmatprep.mubr.bf16.mxu0 0
    %190 = vmatmul.mubr.bf16.gmra.mrb[0].mxu0 %v92
    %v191 = vpop.f32.mrb[0].mxu0
    %v192 = vadd.f32 0.0, %v191
    %v193 = vpop.f32.mrb[0].mxu0
    %v194 = vpop.f32.mrb[0].mxu0
    %v195 = vpop.f32.mrb[0].mxu0
    %196 = vdwg.mxu0
    %v197 = vld [vmem:[%s2] sm:$0x1]
    %v198 = vld [vmem:[%s3] sm:$0x1]
    %199 = vadd.xlane.f32.xlu0 %v192
    %v200 = vpop.xlane.xlu0 %199
    %v201 = vmul.f32 %v200, 0.03125
    %v202 = vsub.f32 %v192, %v201
    %v203 = vmul.f32 %v202, %v91
    %v204 = vmul.f32 %v203, %v203
    %205 = vadd.xlane.f32.xlu0 %v204
    %v206 = vpop.xlane.xlu0 %205
    %v207 = vmul.f32 %v206, 0.03125
    %v208 = vadd.f32 %v207, 1e-05
    %v209 = vrsqrt.pop %v208
    %v210 = vmul.f32 %v203, %v209
    %v212 = vlaneseq
    %v213 = vshrl.u32 %v212, 7
    %v214 = vsub.s32 0, %v213
    %v215 = vrot.slane %v197, %v214
    %v217 = vmul.f32 %v210, %v215
    %v219 = vlaneseq
    %v220 = vshrl.u32 %v219, 7
    %v221 = vsub.s32 0, %v220
    %v222 = vrot.slane %v198, %v221
    %v224 = vadd.f32 %v217, %v222
    %v225 = vmul.f32 %v224, 0.5
    %v226 = vmul.f32 %v224, 0.70710677
    %v227 = verf.f32.pop %v226
    %v228 = vadd.f32 %v227, 1.0
    %v229 = vmul.f32 %v225, %v228
    %v230 = vpack.c.bf16 %v229, %v229
    %v231 = vld [vmem:[#allocation7] sm:$0xf]
    %v232 = vld [vmem:[#allocation7 + $0x4] sm:$0xf]
    %v233 = vld [vmem:[#allocation7 + $0x8] sm:$0xf]
    %v234 = vld [vmem:[#allocation7 + $0xc] sm:$0xf]
    %v235 = vld [vmem:[#allocation7 + $0x10] sm:$0xf]
    %v236 = vld [vmem:[#allocation7 + $0x14] sm:$0xf]
    %v237 = vld [vmem:[#allocation7 + $0x18] sm:$0xf]
    %v238 = vld [vmem:[#allocation7 + $0x1c] sm:$0xf]
    %v239 = vld [vmem:[#allocation7 + $0x20] sm:$0xf]
    %v240 = vld [vmem:[#allocation7 + $0x24] sm:$0xf]
    %v241 = vld [vmem:[#allocation7 + $0x28] sm:$0xf]
    %v242 = vld [vmem:[#allocation7 + $0x2c] sm:$0xf]
    %v243 = vld [vmem:[#allocation7 + $0x30] sm:$0xf]
    %v244 = vld [vmem:[#allocation7 + $0x34] sm:$0xf]
    %v245 = vld [vmem:[#allocation7 + $0x38] sm:$0xf]
    %v246 = vld [vmem:[#allocation7 + $0x3c] sm:$0xf]
    %v263 = vunpack.c.l.b16 %v231
    %v264 = vunpack.c.l.b16 %v232
    %v265 = vunpack.c.l.b16 %v233
    %v266 = vunpack.c.l.b16 %v234
    %v267 = vunpack.c.l.b16 %v235
    %v268 = vunpack.c.l.b16 %v236
    %v269 = vunpack.c.l.b16 %v237
    %v270 = vunpack.c.l.b16 %v238
    %v271 = vunpack.c.l.b16 %v239
    %v272 = vunpack.c.l.b16 %v240
    %v273 = vunpack.c.l.b16 %v241
    %v274 = vunpack.c.l.b16 %v242
    %v275 = vunpack.c.l.b16 %v243
    %v276 = vunpack.c.l.b16 %v244
    %v277 = vunpack.c.l.b16 %v245
    %v278 = vunpack.c.l.b16 %v246
    %v279 = vpack.c.b16 %v264, %v263
    %v280 = vpack.c.b16 %v266, %v265
    %v281 = vpack.c.b16 %v268, %v267
    %v282 = vpack.c.b16 %v270, %v269
    %v283 = vpack.c.b16 %v272, %v271
    %v284 = vpack.c.b16 %v274, %v273
    %v285 = vpack.c.b16 %v276, %v275
    %v286 = vpack.c.b16 %v278, %v277
    %295 = vmatprep.subr.bf16.mxu0 0
    %296 = vmatpush1.bf16.msra.mxu0 %v279
    %297 = vmatprep.subr.bf16.mxu0 0
    %298 = vmatpush1.bf16.msra.mxu0 %v280
    %299 = vmatprep.subr.bf16.mxu0 0
    %300 = vmatpush1.bf16.msra.mxu0 %v281
    %301 = vmatprep.subr.bf16.mxu0 0
    %302 = vmatpush1.bf16.msra.mxu0 %v282
    %303 = vmatprep.subr.bf16.mxu0 0
    %304 = vmatpush1.bf16.msra.mxu0 %v283
    %305 = vmatprep.subr.bf16.mxu0 0
    %306 = vmatpush1.bf16.msra.mxu0 %v284
    %307 = vmatprep.subr.bf16.mxu0 0
    %308 = vmatpush1.bf16.msra.mxu0 %v285
    %309 = vmatprep.subr.bf16.mxu0 0
    %310 = vmatpush1.bf16.msra.mxu0 %v286
    %311 = vmatprep.subr.bf16.mxu0 0
    %312 = vmatpush1.bf16.msra.mxu0 0
    %313 = vmatprep.subr.bf16.mxu0 0
    %314 = vmatpush1.bf16.msra.mxu0 0
    %315 = vmatprep.subr.bf16.mxu0 0
    %316 = vmatpush1.bf16.msra.mxu0 0
    %317 = vmatprep.subr.bf16.mxu0 0
    %318 = vmatpush1.bf16.msra.mxu0 0
    %319 = vmatprep.subr.bf16.mxu0 0
    %320 = vmatpush1.bf16.msra.mxu0 0
    %321 = vmatprep.subr.bf16.mxu0 0
    %322 = vmatpush1.bf16.msra.mxu0 0
    %323 = vmatprep.subr.bf16.mxu0 0
    %324 = vmatpush1.bf16.msra.mxu0 0
    %325 = vmatprep.subr.bf16.mxu0 0
    %326 = vmatpush1.bf16.msra.mxu0 0
    %327 = vmatprep.mubr.bf16.mxu0 0
    %328 = vmatmul.mubr.bf16.gmra.mrb[0].mxu0 %v230
    %v329 = vpop.f32.mrb[0].mxu0
    %v330 = vadd.f32 0.0, %v329
    %v331 = vpop.f32.mrb[0].mxu0
    %v332 = vpop.f32.mrb[0].mxu0
    %v333 = vpop.f32.mrb[0].mxu0
    %334 = vdwg.mxu0
    %v335 = vld [vmem:[%s5] sm:$0x1]
    %v336 = vld [vmem:[%s6] sm:$0x1]
    %337 = vadd.xlane.f32.xlu0 %v330
    %v338 = vpop.xlane.xlu0 %337
    %v339 = vmul.f32 %v338, 0.03125
    %v340 = vsub.f32 %v330, %v339
    %v341 = vmul.f32 %v340, %v91
    %v342 = vmul.f32 %v341, %v341
    %343 = vadd.xlane.f32.xlu0 %v342
    %v344 = vpop.xlane.xlu0 %343
    %v345 = vmul.f32 %v344, 0.03125
    %v346 = vadd.f32 %v345, 1e-05
    %v347 = vrsqrt.pop %v346
    %v348 = vmul.f32 %v341, %v347
    %v350 = vlaneseq
    %v351 = vshrl.u32 %v350, 7
    %v352 = vsub.s32 0, %v351
    %v353 = vrot.slane %v335, %v352
    %v355 = vmul.f32 %v348, %v353
    %v357 = vlaneseq
    %v358 = vshrl.u32 %v357, 7
    %v359 = vsub.s32 0, %v358
    %v360 = vrot.slane %v336, %v359
    %v362 = vadd.f32 %v355, %v360
    %v363 = vmul.f32 %v362, 0.5
    %v364 = vmul.f32 %v362, 0.70710677
    %v365 = verf.f32.pop %v364
    %v366 = vadd.f32 %v365, 1.0
    %v367 = vmul.f32 %v363, %v366
    %v368 = vpack.c.bf16 %v367, %v367
    %v369 = vld [vmem:[#allocation8] sm:$0xf]
    %v370 = vld [vmem:[#allocation8 + $0x4] sm:$0xf]
    %v371 = vld [vmem:[#allocation8 + $0x8] sm:$0xf]
    %v372 = vld [vmem:[#allocation8 + $0xc] sm:$0xf]
    %v373 = vld [vmem:[#allocation8 + $0x10] sm:$0xf]
    %v374 = vld [vmem:[#allocation8 + $0x14] sm:$0xf]
    %v375 = vld [vmem:[#allocation8 + $0x18] sm:$0xf]
    %v376 = vld [vmem:[#allocation8 + $0x1c] sm:$0xf]
    %v377 = vld [vmem:[#allocation8 + $0x20] sm:$0xf]
    %v378 = vld [vmem:[#allocation8 + $0x24] sm:$0xf]
    %v379 = vld [vmem:[#allocation8 + $0x28] sm:$0xf]
    %v380 = vld [vmem:[#allocation8 + $0x2c] sm:$0xf]
    %v381 = vld [vmem:[#allocation8 + $0x30] sm:$0xf]
    %v382 = vld [vmem:[#allocation8 + $0x34] sm:$0xf]
    %v383 = vld [vmem:[#allocation8 + $0x38] sm:$0xf]
    %v384 = vld [vmem:[#allocation8 + $0x3c] sm:$0xf]
    %v385 = vld [vmem:[%s8] sm:$0x1]
    %v387 = vlaneseq
    %v388 = vshrl.u32 %v387, 7
    %v389 = vsub.s32 0, %v388
    %v390 = vrot.slane %v385, %v389
    %v408 = vunpack.c.l.b16 %v369
    %v409 = vunpack.c.l.b16 %v370
    %v410 = vunpack.c.l.b16 %v371
    %v411 = vunpack.c.l.b16 %v372
    %v412 = vunpack.c.l.b16 %v373
    %v413 = vunpack.c.l.b16 %v374
    %v414 = vunpack.c.l.b16 %v375
    %v415 = vunpack.c.l.b16 %v376
    %v416 = vunpack.c.l.b16 %v377
    %v417 = vunpack.c.l.b16 %v378
    %v418 = vunpack.c.l.b16 %v379
    %v419 = vunpack.c.l.b16 %v380
    %v420 = vunpack.c.l.b16 %v381
    %v421 = vunpack.c.l.b16 %v382
    %v422 = vunpack.c.l.b16 %v383
    %v423 = vunpack.c.l.b16 %v384
    %v424 = vpack.c.b16 %v409, %v408
    %v425 = vpack.c.b16 %v411, %v410
    %v426 = vpack.c.b16 %v413, %v412
    %v427 = vpack.c.b16 %v415, %v414
    %v428 = vpack.c.b16 %v417, %v416
    %v429 = vpack.c.b16 %v419, %v418
    %v430 = vpack.c.b16 %v421, %v420
    %v431 = vpack.c.b16 %v423, %v422
    %440 = vmatprep.subr.bf16.mxu0 0
    %441 = vmatpush1.bf16.msra.mxu0 %v424
    %442 = vmatprep.subr.bf16.mxu0 0
    %443 = vmatpush1.bf16.msra.mxu0 %v425
    %444 = vmatprep.subr.bf16.mxu0 0
    %445 = vmatpush1.bf16.msra.mxu0 %v426
    %446 = vmatprep.subr.bf16.mxu0 0
    %447 = vmatpush1.bf16.msra.mxu0 %v427
    %448 = vmatprep.subr.bf16.mxu0 0
    %449 = vmatpush1.bf16.msra.mxu0 %v428
    %450 = vmatprep.subr.bf16.mxu0 0
    %451 = vmatpush1.bf16.msra.mxu0 %v429
    %452 = vmatprep.subr.bf16.mxu0 0
    %453 = vmatpush1.bf16.msra.mxu0 %v430
    %454 = vmatprep.subr.bf16.mxu0 0
    %455 = vmatpush1.bf16.msra.mxu0 %v431
    %456 = vmatprep.subr.bf16.mxu0 0
    %457 = vmatpush1.bf16.msra.mxu0 0
    %458 = vmatprep.subr.bf16.mxu0 0
    %459 = vmatpush1.bf16.msra.mxu0 0
    %460 = vmatprep.subr.bf16.mxu0 0
    %461 = vmatpush1.bf16.msra.mxu0 0
    %462 = vmatprep.subr.bf16.mxu0 0
    %463 = vmatpush1.bf16.msra.mxu0 0
    %464 = vmatprep.subr.bf16.mxu0 0
    %465 = vmatpush1.bf16.msra.mxu0 0
    %466 = vmatprep.subr.bf16.mxu0 0
    %467 = vmatpush1.bf16.msra.mxu0 0
    %468 = vmatprep.subr.bf16.mxu0 0
    %469 = vmatpush1.bf16.msra.mxu0 0
    %470 = vmatprep.subr.bf16.mxu0 0
    %471 = vmatpush1.bf16.msra.mxu0 0
    %472 = vmatprep.mubr.bf16.mxu0 0
    %473 = vmatmul.mubr.bf16.gmra.mrb[0].mxu0 %v368
    %v474 = vpop.f32.mrb[0].mxu0
    %v475 = vadd.f32 %v390, %v474
    %v476 = vpop.f32.mrb[0].mxu0
    %v477 = vpop.f32.mrb[0].mxu0
    %v478 = vpop.f32.mrb[0].mxu0
    %479 = vdwg.mxu0
    %480 = vst [vmem:[#allocation10] sm:$0xff] %v475
    // Predicated region
    $region54: #{tpu_custom_call.1} parent=1 // pred_check
      _
    $region55: #{tpu_custom_call.1} parent=1 // pred_check_branch
      %482 = sbr.rel (0) target = $region57
    $region56: #{tpu_custom_call.1} parent=1 // pred_region
      %s484 = ssub.s32 128, 128
      %485 = vsyncadd [#allocation4], %s484
      %s487 = sshll.u32 [#allocation10], 4
      %s488 = int_to_ptr.vmem [resolvable:$true] %s487
      %490 = dma.vmem_to_hbm [thread:$0]  %s488, 128, %s9, [#allocation4]
    $region57: #{tpu_custom_call.1} parent=1 // pred_fallthru
      _
    // Predicated region
    $region58: #{tpu_custom_call.1} parent=1 // pred_check
      _
    $region59: #{tpu_custom_call.1} parent=1 // pred_check_branch
      %492 = sbr.rel (0) target = $region61
    $region60: #{tpu_custom_call.1} parent=1 // pred_region
      %493 = dma.done [#allocation4], 128
    $region61: #{tpu_custom_call.1} parent=1 // pred_fallthru
      _
    %494 = vsyncpa [#allocation3], 1
    %495 = vsyncpa [#allocation6], 1
    %496 = vsyncpa [#allocation9], 1
    %497 = vsyncpa [#allocation4], 1

</llo_original>
